<compile_context>
chip_gen: v5e
topology: v5e:2x2
jax: 0.10.0
libtpu: 0.0.40
codegen_flags: <defaults>
</compile_context>

<pallas_src>
import functools
import math

import jax
import jax.numpy as jnp
from jax import lax
from jax.experimental import pallas as pl
from jax.experimental.pallas import tpu as pltpu


def _attention_kernel(x_ref, wqkv_ref, bqkv_ref, wo_ref, bo_ref, o_ref, *,
                      num_heads: int):
  """One grid step == one batch element (batch dim squeezed out of the refs).

  x_ref    : (L, D)        bf16
  wqkv_ref : (D, 3*H*D)    bf16   (1/sqrt(D) folded into the Q columns)
  bqkv_ref : (1, 3*H*D)    f32
  wo_ref   : (H*D, D)      bf16   (wo stacked H times, 1/H folded in)
  bo_ref   : (1, D)        f32
  o_ref    : (L, D)        f32
  """
  L, D = x_ref.shape
  H = num_heads
  HD = H * D

  # Fused QKV projection: one MXU matmul, bf16 operands, f32 accumulation.
  qkv = jnp.dot(x_ref[...], wqkv_ref[...],
                preferred_element_type=jnp.float32) + bqkv_ref[...]  # (L, 3HD)

  # Q/K/V splits at lane offsets 0 / HD / 2*HD.  With H*D == 128 these are
  # vreg-aligned and relayout-free (correct for any H*D, just cheaper here).
  q_all = qkv[:, 0 * HD:1 * HD]                       # (L, H*D) f32, pre-scaled
  k_all = qkv[:, 1 * HD:2 * HD]                       # (L, H*D) f32
  v_all = qkv[:, 2 * HD:3 * HD].astype(jnp.bfloat16)  # (L, H*D) bf16 (PV operand)

  # Per-head attention WITHOUT lane-offset slices: restrict each head's
  # contraction to its own lane group [h*D, (h+1)*D) with a lane mask.  The
  # contraction width stays H*D (one MXU pass either way), so the mask is the
  # only extra work and it is a cheap VPU select.
  lane = lax.broadcasted_iota(jnp.int32, (L, HD), 1)  # lane index per element
  dn_nt = (((1,), (1,)), ((), ()))                    # contract last dims (no k.T)

  # Per-head contexts land in their own disjoint lane groups of `ctx`.
  ctx = jnp.zeros((L, HD), dtype=jnp.float32)
  for h in range(H):                                  # H small & static -> unrolled
    in_head = (lane >= h * D) & (lane < (h + 1) * D)  # (L, H*D) bool

    # scores: s[i,j] = sum_{d in head h} q[i,d] * k[j,d]   (scale pre-folded)
    k_h = jnp.where(in_head, k_all, 0.0)
    s = lax.dot_general(q_all, k_h, dn_nt,
                        preferred_element_type=jnp.float32)          # (L, L)
    s = s - jnp.max(s, axis=-1, keepdims=True)
    p = jnp.exp(s)
    p = p * pl.reciprocal(jnp.sum(p, axis=-1, keepdims=True), approx=True)

    # ctx[:, h*D:(h+1)*D] += p @ v_h ; other lanes receive exact zeros.
    v_h = jnp.where(in_head, v_all, 0)                               # bf16
    ctx = ctx + jnp.dot(p.astype(jnp.bfloat16), v_h,
                        preferred_element_type=jnp.float32)          # (L, H*D)

  # Head combine (mean, 1/H pre-folded) + output projection in ONE matmul:
  # wo_ref is wo stacked vertically per head, so contracting the full H*D rows
  # sums the per-head contexts.
  out = jnp.dot(ctx.astype(jnp.bfloat16), wo_ref[...],
                preferred_element_type=jnp.float32) + bo_ref[...]    # (L, D)
  o_ref[...] = out.astype(o_ref.dtype)


def attention_forward(x_ncl, kparams, *, num_heads: int, model_dim: int):
  """x_ncl: [B, model_dim, L] float32 (PyTorch NCL). Returns [B, model_dim, L].

  `kparams` must come from `prepare_params` (fused, stacked, pre-scaled, bf16).
  """
  B, D, L = x_ncl.shape
  assert D == model_dim
  H = num_heads
  HD3 = 3 * H * D

  # Glue: NCL -> [B, L, D]; cast to bf16 (MXU operand; accumulation stays f32).
  x_bld = jnp.transpose(x_ncl, (0, 2, 1)).astype(jnp.bfloat16)

  kernel = functools.partial(_attention_kernel, num_heads=H)

  out_bld = pl.pallas_call(
      kernel,
      out_shape=jax.ShapeDtypeStruct((B, L, D), jnp.float32),
      grid_spec=pltpu.PrefetchScalarGridSpec(
          num_scalar_prefetch=0,
          # One batch element per step: grid >= 2, so v7x's two TensorCores
          # both get work under "parallel" semantics.  For large B, group
          # several elements per step to amortize the ~0.35us step overhead.
          grid=(B,),
          in_specs=[
              pl.BlockSpec((None, L, D), lambda b: (b, 0, 0)),   # x (squeezed b)
              pl.BlockSpec((D, HD3), lambda b: (0, 0)),          # w_qkv  (bf16)
              pl.BlockSpec((1, HD3), lambda b: (0, 0)),          # b_qkv  (f32)
              pl.BlockSpec((H * D, D), lambda b: (0, 0)),        # w_out stacked (bf16)
              pl.BlockSpec((1, D), lambda b: (0, 0)),            # b_out  (f32)
          ],
          out_specs=pl.BlockSpec((None, L, D), lambda b: (b, 0, 0)),
      ),
      compiler_params=pltpu.CompilerParams(
          dimension_semantics=("parallel",),       # independent batch elements
          vmem_limit_bytes=32 * 1024 * 1024),      # explicit; fits v7x's 64 MiB
  )(x_bld, kparams["w_qkv"], kparams["b_qkv"],
    kparams["w_out"], kparams["b_out"])

  return jnp.transpose(out_bld, (0, 2, 1))         # glue: [B, L, D] -> NCL


def init_params(key, num_heads: int, model_dim: int):
  """Deterministic synthetic params.  Conv1d(Cin, Cout, 1) weight [Cout, Cin, 1]
  is stored already transposed/squeezed as [Cin, Cout] for channels-last matmul."""
  D, H = model_dim, num_heads
  ks = jax.random.split(key, 8)
  s = 0.1
  return {
      "wq": s * jax.random.normal(ks[0], (D, H * D), jnp.float32),
      "bq": s * jax.random.normal(ks[1], (1, H * D), jnp.float32),
      "wk": s * jax.random.normal(ks[2], (D, H * D), jnp.float32),
      "bk": s * jax.random.normal(ks[3], (1, H * D), jnp.float32),
      "wv": s * jax.random.normal(ks[4], (D, H * D), jnp.float32),
      "bv": s * jax.random.normal(ks[5], (1, H * D), jnp.float32),
      "wo": s * jax.random.normal(ks[6], (D, D), jnp.float32),
      "bo": s * jax.random.normal(ks[7], (1, D), jnp.float32),
  }


def prepare_params(params, *, num_heads: int, model_dim: int):
  """One-time host-side prep.

  * Q/K/V weights fused into one (D, 3*H*D) matrix; 1/sqrt(D) folded into the
    Q columns and bias so scores need no runtime scale.
  * Output weight stacked vertically per head, (H*D, D), with the 1/num_heads
    head-mean folded in, so `ctx (L,H*D) @ w_out` performs head-combine +
    projection in one matmul.
  * Matmul operands cast to bf16 (f32 accumulation in-kernel); biases stay f32.
  """
  D, H = model_dim, num_heads
  scale = 1.0 / math.sqrt(float(D))
  w_qkv = jnp.concatenate(
      [params["wq"] * scale, params["wk"], params["wv"]], axis=1)    # (D, 3HD)
  b_qkv = jnp.concatenate(
      [params["bq"] * scale, params["bk"], params["bv"]], axis=1)    # (1, 3HD)
  w_out = jnp.tile(params["wo"], (H, 1)) * (1.0 / float(H))          # (H*D, D)
  return {
      "w_qkv": w_qkv.astype(jnp.bfloat16),
      "b_qkv": b_qkv.astype(jnp.float32),
      "w_out": w_out.astype(jnp.bfloat16),
      "b_out": params["bo"].astype(jnp.float32),
  }


def reference_forward(x_ncl, params, *, num_heads: int, model_dim: int):
  """Pure-JAX f32 reference of the same semantics (raw, unfused params)."""
  B, D, L = x_ncl.shape
  x = jnp.transpose(x_ncl, (0, 2, 1))             # B, L, D
  q = x @ params["wq"] + params["bq"]             # B, L, H*D
  k = x @ params["wk"] + params["bk"]
  v = x @ params["wv"] + params["bv"]
  def split(t):
    return t.reshape(B, L, num_heads, D).transpose(0, 2, 1, 3)  # B, H, L, D
  q, k, v = split(q), split(k), split(v)
  s = jnp.einsum("bhqd,bhkd->bhqk", q, k) / math.sqrt(model_dim)
  p = jax.nn.softmax(s, axis=-1)
  ctx = jnp.einsum("bhqk,bhkd->bhqd", p, v).mean(axis=1)        # B, L, D
  out = ctx @ params["wo"] + params["bo"]
  return jnp.transpose(out, (0, 2, 1))            # B, D, L


if __name__ == "__main__":
  NUM_HEADS = 4
  MODEL_DIM = 32
  BATCH = 2
  SEQ = 8

  key = jax.random.PRNGKey(0)
  k_x, k_p = jax.random.split(key)
  x = jax.random.normal(k_x, (BATCH, MODEL_DIM, SEQ), jnp.float32)  # NCL input
  params = init_params(k_p, NUM_HEADS, MODEL_DIM)
  kparams = prepare_params(params, num_heads=NUM_HEADS, model_dim=MODEL_DIM)

  out = attention_forward(x, kparams, num_heads=NUM_HEADS, model_dim=MODEL_DIM)
  out = jax.block_until_ready(out)

  ref = reference_forward(x, params, num_heads=NUM_HEADS, model_dim=MODEL_DIM)
  assert out.shape == (BATCH, MODEL_DIM, SEQ)
  # Tolerance covers bf16 MXU operands (x, weights, P/V, ctx) vs. the f32
  # reference plus the EUP approx-reciprocal in the softmax denominator.
  err = float(jnp.max(jnp.abs(out - ref)))
  assert jnp.allclose(out, ref, atol=2e-2, rtol=2e-2), err

  print("KERNEL_OK")
</pallas_src>

<mosaic_0001>
module attributes {stable_mosaic.version = 11 : i64} {
  func.func @_attention_kernel(%arg0: i32, %arg1: memref<1x8x32xbf16, #tpu.memory_space<vmem>>, %arg2: memref<32x384xbf16, #tpu.memory_space<vmem>>, %arg3: memref<1x384xf32, #tpu.memory_space<vmem>>, %arg4: memref<128x32xbf16, #tpu.memory_space<vmem>>, %arg5: memref<1x32xf32, #tpu.memory_space<vmem>>, %arg6: memref<1x8x32xf32, #tpu.memory_space<vmem>>) attributes {dimension_semantics = [#tpu.dimension_semantics<parallel>], iteration_bounds = array<i64: 2>, scalar_prefetch = 0 : i64, scratch_operands = 0 : i64, tpu.core_type = #tpu.core_type<tc>, window_params = [{transform_indices = @transform_0, window_bounds = array<i64: 1, 8, 32>}, {pipeline_mode = #tpu.pipeline_mode<synchronous>, transform_indices = @transform_1, window_bounds = array<i64: 32, 384>}, {pipeline_mode = #tpu.pipeline_mode<synchronous>, transform_indices = @transform_2, window_bounds = array<i64: 1, 384>}, {pipeline_mode = #tpu.pipeline_mode<synchronous>, transform_indices = @transform_3, window_bounds = array<i64: 128, 32>}, {pipeline_mode = #tpu.pipeline_mode<synchronous>, transform_indices = @transform_4, window_bounds = array<i64: 1, 32>}, {transform_indices = @transform_5, window_bounds = array<i64: 1, 8, 32>}]} {
    %c0 = arith.constant 0 : index
    %c0_0 = arith.constant 0 : index
    %c0_1 = arith.constant 0 : index
    %0 = vector.load %arg1[%c0, %c0_0, %c0_1] : memref<1x8x32xbf16, #tpu.memory_space<vmem>>, vector<1x8x32xbf16>
    %1 = vector.shape_cast %0 : vector<1x8x32xbf16> to vector<8x32xbf16>
    %c0_2 = arith.constant 0 : index
    %c0_3 = arith.constant 0 : index
    %2 = vector.load %arg2[%c0_2, %c0_3] : memref<32x384xbf16, #tpu.memory_space<vmem>>, vector<32x384xbf16>
    %cst = arith.constant dense<0.000000e+00> : vector<8x384xf32>
    %3 = tpu.matmul %1, %2, %cst {dimension_numbers = #tpu.dot_dimension_numbers<[1], [0], [0], [1], [0, 0, 1, 1], [], []>} : vector<8x32xbf16>, vector<32x384xbf16>, vector<8x384xf32> -> vector<8x384xf32>
    %c0_4 = arith.constant 0 : index
    %c0_5 = arith.constant 0 : index
    %4 = vector.load %arg3[%c0_4, %c0_5] : memref<1x384xf32, #tpu.memory_space<vmem>>, vector<1x384xf32>
    %5 = vector.broadcast %4 : vector<1x384xf32> to vector<8x384xf32>
    %6 = arith.addf %3, %5 : vector<8x384xf32>
    %7 = vector.extract_strided_slice %6 {offsets = [0, 0], sizes = [8, 128], strides = [1, 1]} : vector<8x384xf32> to vector<8x128xf32>
    %8 = vector.extract_strided_slice %6 {offsets = [0, 128], sizes = [8, 128], strides = [1, 1]} : vector<8x384xf32> to vector<8x128xf32>
    %9 = vector.extract_strided_slice %6 {offsets = [0, 256], sizes = [8, 128], strides = [1, 1]} : vector<8x384xf32> to vector<8x128xf32>
    %10 = arith.truncf %9 : vector<8x128xf32> to vector<8x128xbf16>
    %11 = tpu.iota {dimensions = array<i32: 1>} : vector<8x128xi32>
    %cst_6 = arith.constant 0.000000e+00 : f32
    %12 = vector.broadcast %cst_6 : f32 to vector<8x128xf32>
    %c0_i32 = arith.constant 0 : i32
    %13 = vector.broadcast %c0_i32 : i32 to vector<8x128xi32>
    %14 = arith.cmpi sge, %11, %13 : vector<8x128xi32>
    %c32_i32 = arith.constant 32 : i32
    %15 = vector.broadcast %c32_i32 : i32 to vector<8x128xi32>
    %16 = arith.cmpi slt, %11, %15 : vector<8x128xi32>
    %17 = arith.andi %14, %16 : vector<8x128xi1>
    %cst_7 = arith.constant 0.000000e+00 : f32
    %18 = vector.broadcast %cst_7 : f32 to vector<8x128xf32>
    %19 = arith.select %17, %8, %18 : vector<8x128xi1>, vector<8x128xf32>
    %cst_8 = arith.constant dense<0.000000e+00> : vector<8x8xf32>
    %20 = tpu.matmul %7, %19, %cst_8 {dimension_numbers = #tpu.dot_dimension_numbers<[1], [1], [0], [0], [0, 0, 1, 0], [], []>} : vector<8x128xf32>, vector<8x128xf32>, vector<8x8xf32> -> vector<8x8xf32>
    %cst_9 = arith.constant dense<0xFF800000> : vector<8xf32>
    %21 = vector.multi_reduction <maximumf>, %20, %cst_9 [1] : vector<8x8xf32> to vector<8xf32>
    %22 = vector.shape_cast %21 : vector<8xf32> to vector<8x1xf32>
    %23 = vector.broadcast %22 : vector<8x1xf32> to vector<8x8xf32>
    %24 = arith.subf %20, %23 : vector<8x8xf32>
    %25 = math.exp %24 : vector<8x8xf32>
    %cst_10 = arith.constant dense<0.000000e+00> : vector<8xf32>
    %26 = vector.multi_reduction <add>, %25, %cst_10 [1] : vector<8x8xf32> to vector<8xf32>
    %27 = vector.shape_cast %26 : vector<8xf32> to vector<8x1xf32>
    %28 = tpu.reciprocal %27 {approx = true} : vector<8x1xf32> -> vector<8x1xf32>
    %29 = vector.broadcast %28 : vector<8x1xf32> to vector<8x8xf32>
    %30 = arith.mulf %25, %29 : vector<8x8xf32>
    %c0_i32_11 = arith.constant 0 : i32
    %31 = arith.sitofp %c0_i32_11 : i32 to bf16
    %32 = vector.broadcast %31 : bf16 to vector<8x128xbf16>
    %33 = arith.select %17, %10, %32 : vector<8x128xi1>, vector<8x128xbf16>
    %34 = arith.truncf %30 : vector<8x8xf32> to vector<8x8xbf16>
    %cst_12 = arith.constant dense<0.000000e+00> : vector<8x128xf32>
    %35 = tpu.matmul %34, %33, %cst_12 {dimension_numbers = #tpu.dot_dimension_numbers<[1], [0], [0], [1], [0, 0, 1, 1], [], []>} : vector<8x8xbf16>, vector<8x128xbf16>, vector<8x128xf32> -> vector<8x128xf32>
    %36 = arith.addf %12, %35 : vector<8x128xf32>
    %c32_i32_13 = arith.constant 32 : i32
    %37 = vector.broadcast %c32_i32_13 : i32 to vector<8x128xi32>
    %38 = arith.cmpi sge, %11, %37 : vector<8x128xi32>
    %c64_i32 = arith.constant 64 : i32
    %39 = vector.broadcast %c64_i32 : i32 to vector<8x128xi32>
    %40 = arith.cmpi slt, %11, %39 : vector<8x128xi32>
    %41 = arith.andi %38, %40 : vector<8x128xi1>
    %cst_14 = arith.constant 0.000000e+00 : f32
    %42 = vector.broadcast %cst_14 : f32 to vector<8x128xf32>
    %43 = arith.select %41, %8, %42 : vector<8x128xi1>, vector<8x128xf32>
    %cst_15 = arith.constant dense<0.000000e+00> : vector<8x8xf32>
    %44 = tpu.matmul %7, %43, %cst_15 {dimension_numbers = #tpu.dot_dimension_numbers<[1], [1], [0], [0], [0, 0, 1, 0], [], []>} : vector<8x128xf32>, vector<8x128xf32>, vector<8x8xf32> -> vector<8x8xf32>
    %cst_16 = arith.constant dense<0xFF800000> : vector<8xf32>
    %45 = vector.multi_reduction <maximumf>, %44, %cst_16 [1] : vector<8x8xf32> to vector<8xf32>
    %46 = vector.shape_cast %45 : vector<8xf32> to vector<8x1xf32>
    %47 = vector.broadcast %46 : vector<8x1xf32> to vector<8x8xf32>
    %48 = arith.subf %44, %47 : vector<8x8xf32>
    %49 = math.exp %48 : vector<8x8xf32>
    %cst_17 = arith.constant dense<0.000000e+00> : vector<8xf32>
    %50 = vector.multi_reduction <add>, %49, %cst_17 [1] : vector<8x8xf32> to vector<8xf32>
    %51 = vector.shape_cast %50 : vector<8xf32> to vector<8x1xf32>
    %52 = tpu.reciprocal %51 {approx = true} : vector<8x1xf32> -> vector<8x1xf32>
    %53 = vector.broadcast %52 : vector<8x1xf32> to vector<8x8xf32>
    %54 = arith.mulf %49, %53 : vector<8x8xf32>
    %c0_i32_18 = arith.constant 0 : i32
    %55 = arith.sitofp %c0_i32_18 : i32 to bf16
    %56 = vector.broadcast %55 : bf16 to vector<8x128xbf16>
    %57 = arith.select %41, %10, %56 : vector<8x128xi1>, vector<8x128xbf16>
    %58 = arith.truncf %54 : vector<8x8xf32> to vector<8x8xbf16>
    %cst_19 = arith.constant dense<0.000000e+00> : vector<8x128xf32>
    %59 = tpu.matmul %58, %57, %cst_19 {dimension_numbers = #tpu.dot_dimension_numbers<[1], [0], [0], [1], [0, 0, 1, 1], [], []>} : vector<8x8xbf16>, vector<8x128xbf16>, vector<8x128xf32> -> vector<8x128xf32>
    %60 = arith.addf %36, %59 : vector<8x128xf32>
    %c64_i32_20 = arith.constant 64 : i32
    %61 = vector.broadcast %c64_i32_20 : i32 to vector<8x128xi32>
    %62 = arith.cmpi sge, %11, %61 : vector<8x128xi32>
    %c96_i32 = arith.constant 96 : i32
    %63 = vector.broadcast %c96_i32 : i32 to vector<8x128xi32>
    %64 = arith.cmpi slt, %11, %63 : vector<8x128xi32>
    %65 = arith.andi %62, %64 : vector<8x128xi1>
    %cst_21 = arith.constant 0.000000e+00 : f32
    %66 = vector.broadcast %cst_21 : f32 to vector<8x128xf32>
    %67 = arith.select %65, %8, %66 : vector<8x128xi1>, vector<8x128xf32>
    %cst_22 = arith.constant dense<0.000000e+00> : vector<8x8xf32>
    %68 = tpu.matmul %7, %67, %cst_22 {dimension_numbers = #tpu.dot_dimension_numbers<[1], [1], [0], [0], [0, 0, 1, 0], [], []>} : vector<8x128xf32>, vector<8x128xf32>, vector<8x8xf32> -> vector<8x8xf32>
    %cst_23 = arith.constant dense<0xFF800000> : vector<8xf32>
    %69 = vector.multi_reduction <maximumf>, %68, %cst_23 [1] : vector<8x8xf32> to vector<8xf32>
    %70 = vector.shape_cast %69 : vector<8xf32> to vector<8x1xf32>
    %71 = vector.broadcast %70 : vector<8x1xf32> to vector<8x8xf32>
    %72 = arith.subf %68, %71 : vector<8x8xf32>
    %73 = math.exp %72 : vector<8x8xf32>
    %cst_24 = arith.constant dense<0.000000e+00> : vector<8xf32>
    %74 = vector.multi_reduction <add>, %73, %cst_24 [1] : vector<8x8xf32> to vector<8xf32>
    %75 = vector.shape_cast %74 : vector<8xf32> to vector<8x1xf32>
    %76 = tpu.reciprocal %75 {approx = true} : vector<8x1xf32> -> vector<8x1xf32>
    %77 = vector.broadcast %76 : vector<8x1xf32> to vector<8x8xf32>
    %78 = arith.mulf %73, %77 : vector<8x8xf32>
    %c0_i32_25 = arith.constant 0 : i32
    %79 = arith.sitofp %c0_i32_25 : i32 to bf16
    %80 = vector.broadcast %79 : bf16 to vector<8x128xbf16>
    %81 = arith.select %65, %10, %80 : vector<8x128xi1>, vector<8x128xbf16>
    %82 = arith.truncf %78 : vector<8x8xf32> to vector<8x8xbf16>
    %cst_26 = arith.constant dense<0.000000e+00> : vector<8x128xf32>
    %83 = tpu.matmul %82, %81, %cst_26 {dimension_numbers = #tpu.dot_dimension_numbers<[1], [0], [0], [1], [0, 0, 1, 1], [], []>} : vector<8x8xbf16>, vector<8x128xbf16>, vector<8x128xf32> -> vector<8x128xf32>
    %84 = arith.addf %60, %83 : vector<8x128xf32>
    %c96_i32_27 = arith.constant 96 : i32
    %85 = vector.broadcast %c96_i32_27 : i32 to vector<8x128xi32>
    %86 = arith.cmpi sge, %11, %85 : vector<8x128xi32>
    %c128_i32 = arith.constant 128 : i32
    %87 = vector.broadcast %c128_i32 : i32 to vector<8x128xi32>
    %88 = arith.cmpi slt, %11, %87 : vector<8x128xi32>
    %89 = arith.andi %86, %88 : vector<8x128xi1>
    %cst_28 = arith.constant 0.000000e+00 : f32
    %90 = vector.broadcast %cst_28 : f32 to vector<8x128xf32>
    %91 = arith.select %89, %8, %90 : vector<8x128xi1>, vector<8x128xf32>
    %cst_29 = arith.constant dense<0.000000e+00> : vector<8x8xf32>
    %92 = tpu.matmul %7, %91, %cst_29 {dimension_numbers = #tpu.dot_dimension_numbers<[1], [1], [0], [0], [0, 0, 1, 0], [], []>} : vector<8x128xf32>, vector<8x128xf32>, vector<8x8xf32> -> vector<8x8xf32>
    %cst_30 = arith.constant dense<0xFF800000> : vector<8xf32>
    %93 = vector.multi_reduction <maximumf>, %92, %cst_30 [1] : vector<8x8xf32> to vector<8xf32>
    %94 = vector.shape_cast %93 : vector<8xf32> to vector<8x1xf32>
    %95 = vector.broadcast %94 : vector<8x1xf32> to vector<8x8xf32>
    %96 = arith.subf %92, %95 : vector<8x8xf32>
    %97 = math.exp %96 : vector<8x8xf32>
    %cst_31 = arith.constant dense<0.000000e+00> : vector<8xf32>
    %98 = vector.multi_reduction <add>, %97, %cst_31 [1] : vector<8x8xf32> to vector<8xf32>
    %99 = vector.shape_cast %98 : vector<8xf32> to vector<8x1xf32>
    %100 = tpu.reciprocal %99 {approx = true} : vector<8x1xf32> -> vector<8x1xf32>
    %101 = vector.broadcast %100 : vector<8x1xf32> to vector<8x8xf32>
    %102 = arith.mulf %97, %101 : vector<8x8xf32>
    %c0_i32_32 = arith.constant 0 : i32
    %103 = arith.sitofp %c0_i32_32 : i32 to bf16
    %104 = vector.broadcast %103 : bf16 to vector<8x128xbf16>
    %105 = arith.select %89, %10, %104 : vector<8x128xi1>, vector<8x128xbf16>
    %106 = arith.truncf %102 : vector<8x8xf32> to vector<8x8xbf16>
    %cst_33 = arith.constant dense<0.000000e+00> : vector<8x128xf32>
    %107 = tpu.matmul %106, %105, %cst_33 {dimension_numbers = #tpu.dot_dimension_numbers<[1], [0], [0], [1], [0, 0, 1, 1], [], []>} : vector<8x8xbf16>, vector<8x128xbf16>, vector<8x128xf32> -> vector<8x128xf32>
    %108 = arith.addf %84, %107 : vector<8x128xf32>
    %109 = arith.truncf %108 : vector<8x128xf32> to vector<8x128xbf16>
    %c0_34 = arith.constant 0 : index
    %c0_35 = arith.constant 0 : index
    %110 = vector.load %arg4[%c0_34, %c0_35] : memref<128x32xbf16, #tpu.memory_space<vmem>>, vector<128x32xbf16>
    %cst_36 = arith.constant dense<0.000000e+00> : vector<8x32xf32>
    %111 = tpu.matmul %109, %110, %cst_36 {dimension_numbers = #tpu.dot_dimension_numbers<[1], [0], [0], [1], [0, 0, 1, 1], [], []>} : vector<8x128xbf16>, vector<128x32xbf16>, vector<8x32xf32> -> vector<8x32xf32>
    %c0_37 = arith.constant 0 : index
    %c0_38 = arith.constant 0 : index
    %112 = vector.load %arg5[%c0_37, %c0_38] : memref<1x32xf32, #tpu.memory_space<vmem>>, vector<1x32xf32>
    %113 = vector.broadcast %112 : vector<1x32xf32> to vector<8x32xf32>
    %114 = arith.addf %111, %113 : vector<8x32xf32>
    %c0_39 = arith.constant 0 : index
    %c0_40 = arith.constant 0 : index
    %c0_41 = arith.constant 0 : index
    %115 = vector.load %arg6[%c0_39, %c0_40, %c0_41] : memref<1x8x32xf32, #tpu.memory_space<vmem>>, vector<1x8x32xf32>
    %116 = vector.shape_cast %115 : vector<1x8x32xf32> to vector<8x32xf32>
    %117 = vector.shape_cast %114 : vector<8x32xf32> to vector<1x8x32xf32>
    tpu.vector_store %arg6[%c0_39, %c0_40, %c0_41], %117 {strides = array<i32>} : memref<1x8x32xf32, #tpu.memory_space<vmem>>, vector<1x8x32xf32>,
    return
  }
  func.func @transform_0(%arg0: i32) -> (i32, i32, i32) {
    %c0_i32 = arith.constant 0 : i32
    %c0_i32_0 = arith.constant 0 : i32
    %c0_i32_1 = arith.constant 0 : i32
    return %arg0, %c0_i32, %c0_i32_0 : i32, i32, i32
  }
  func.func @transform_1(%arg0: i32) -> (i32, i32) {
    %c0_i32 = arith.constant 0 : i32
    %c0_i32_0 = arith.constant 0 : i32
    %c0_i32_1 = arith.constant 0 : i32
    return %c0_i32, %c0_i32_0 : i32, i32
  }
  func.func @transform_2(%arg0: i32) -> (i32, i32) {
    %c0_i32 = arith.constant 0 : i32
    %c0_i32_0 = arith.constant 0 : i32
    %c0_i32_1 = arith.constant 0 : i32
    return %c0_i32, %c0_i32_0 : i32, i32
  }
  func.func @transform_3(%arg0: i32) -> (i32, i32) {
    %c0_i32 = arith.constant 0 : i32
    %c0_i32_0 = arith.constant 0 : i32
    %c0_i32_1 = arith.constant 0 : i32
    return %c0_i32, %c0_i32_0 : i32, i32
  }
  func.func @transform_4(%arg0: i32) -> (i32, i32) {
    %c0_i32 = arith.constant 0 : i32
    %c0_i32_0 = arith.constant 0 : i32
    %c0_i32_1 = arith.constant 0 : i32
    return %c0_i32, %c0_i32_0 : i32, i32
  }
  func.func @transform_5(%arg0: i32) -> (i32, i32, i32) {
    %c0_i32 = arith.constant 0 : i32
    %c0_i32_0 = arith.constant 0 : i32
    %c0_i32_1 = arith.constant 0 : i32
    return %arg0, %c0_i32, %c0_i32_0 : i32, i32, i32
  }
}

</mosaic_0001>

<llo_original>
// kernel: tpu_custom_call.1
$region0: #{tpu_custom_call.1}
  #allocation0 [shape = 'u32[]', space=smem, size = 0x4, offset = 0x4, fixed_abs, tag = 'smem constant byte address 0x4 - core index']
  #allocation1 [shape = 'u32[72,128]{1,0:T(1,128)}', space=vmem, size = 0x9000, scoped, tag = 'internal scratch']
  %s0 = inlined_call_operand.vmem [shape: bf16[2,8,32], index: 0, kind: input, shape index: {}]
  %s1 = inlined_call_operand.vmem [shape: bf16[32,384], index: 1, kind: input, shape index: {}]
  %s2 = inlined_call_operand.vmem [shape: f32[1,384], index: 2, kind: input, shape index: {}]
  %s3 = inlined_call_operand.vmem [shape: bf16[128,32], index: 3, kind: input, shape index: {}]
  %s4 = inlined_call_operand.vmem [shape: f32[1,32], index: 4, kind: input, shape index: {}]
  %s5 = inlined_call_operand.hbm [shape: f32[2,8,32], index: 5, kind: output, shape index: {}]
  %s6 = sld [smem:[#allocation0]]
  $region53: #{tpu_custom_call.1} parent=0
    _
  %s8 = ssub.s32 1, %s6
  %s9 = scalar_select 0, %s8, %s6
  $region1: #{tpu_custom_call.1} parent=0
    #allocation2 [shape = 'u8[8192]{0}', space=vmem, size = 0x2000, scoped, tag = 'output window, operand 0']
    #allocation3 [shape = 's32[2]{0}', space=sflag, size = 0x8, scoped, tag = 'scoped memory for tpu_custom_call.1']
    %10 = vsyncpa [#allocation3], 0
    %s11 = scalar_lea.sflag [#allocation3], 1
    %12 = vsyncpa %s11, 0
    loop: start=0, step=1, limit=4
    $region2: #{tpu_custom_call.1} parent=1 // loop_pre_header
      _
    $region3: #{tpu_custom_call.1} parent=1 // loop_header
      %s14 = sphi 0, %s18
      %p15 = scmp.ge.s32.totalorder %s14, 4
      %s24 = sphi 0, %s26
      %s27 = sphi 0, %s24
      %s28 = sphi 0, %s27
      %s44 = sphi 0, %s28
      %s48 = sphi 0, %s48
      %s50 = sphi 0, %s48
      %s51 = sphi 0, %s50
      %s65 = sphi 0, %s51
      %s69 = sphi 0, %s69
      %s71 = sphi 0, %s69
      %s72 = sphi 0, %s71
      %s86 = sphi 0, %s72
      %s90 = sphi 0, %s90
      %s92 = sphi 0, %s90
      %s93 = sphi 0, %s92
      %s107 = sphi 0, %s93
      %s111 = sphi 0, %s111
      %s113 = sphi 0, %s111
      %s114 = sphi 0, %s113
      %s128 = sphi 0, %s114
      %s134 = sphi 0, %s136
      %s137 = sphi 0, %s134
      %s138 = sphi 0, %s137
      %s154 = sphi 0, %s138
    $region4: #{tpu_custom_call.1} parent=1 // loop_header_branch
      %17 = sbr.rel (%p15) target = $region8
    $region5: #{tpu_custom_call.1} parent=1 // loop_body
      %s19 = ssub.s32 %s14, 1
      %s20 = ssub.s32 %s14, 2
      %s21 = sadd.s32 %s14, 1
      %s22 = ssub.s32 %s14, %s21
      %p23 = scmp.eq.s32.totalorder %s22, 0
      %s25 = sadd.s32 %s24, 1
      %s26 = scalar_select %p23, %s24, %s25
      %p29 = pneg %p23
      %p30 = scmp.eq.s32.totalorder %s14, 1
      %p31 = por %p29, %p30
      %p32 = scmp.ne.s32.totalorder %s24, %s27
      %p33 = scmp.eq.s32.totalorder %s14, 0
      %p34 = por %p32, %p33
      %p35 = scmp.ne.s32.totalorder %s24, %s27
      %p36 = scmp.eq.s32.totalorder %s19, 1
      %p37 = por %p35, %p36
      %p38 = scmp.ne.s32.totalorder %s27, %s28
      %p39 = scmp.eq.s32.totalorder %s19, 0
      %p40 = por %p38, %p39
      %p41 = scmp.ne.s32.totalorder %s27, %s28
      %p42 = scmp.eq.s32.totalorder %s20, 1
      %p43 = por %p41, %p42
      %p45 = scmp.ne.s32.totalorder %s28, %s44
      %p46 = scmp.eq.s32.totalorder %s20, 0
      %p47 = por %p45, %p46
      %s49 = sadd.s32 %s48, 1
      %p52 = scmp.eq.s32.totalorder %s14, 1
      %p53 = scmp.ne.s32.totalorder %s48, %s50
      %p54 = scmp.eq.s32.totalorder %s14, 0
      %p55 = por %p53, %p54
      %p56 = scmp.ne.s32.totalorder %s48, %s50
      %p57 = scmp.eq.s32.totalorder %s19, 1
      %p58 = por %p56, %p57
      %p59 = scmp.ne.s32.totalorder %s50, %s51
      %p60 = scmp.eq.s32.totalorder %s19, 0
      %p61 = por %p59, %p60
      %p62 = scmp.ne.s32.totalorder %s50, %s51
      %p63 = scmp.eq.s32.totalorder %s20, 1
      %p64 = por %p62, %p63
      %p66 = scmp.ne.s32.totalorder %s51, %s65
      %p67 = scmp.eq.s32.totalorder %s20, 0
      %p68 = por %p66, %p67
      %s70 = sadd.s32 %s69, 1
      %p73 = scmp.eq.s32.totalorder %s14, 1
      %p74 = scmp.ne.s32.totalorder %s69, %s71
      %p75 = scmp.eq.s32.totalorder %s14, 0
      %p76 = por %p74, %p75
      %p77 = scmp.ne.s32.totalorder %s69, %s71
      %p78 = scmp.eq.s32.totalorder %s19, 1
      %p79 = por %p77, %p78
      %p80 = scmp.ne.s32.totalorder %s71, %s72
      %p81 = scmp.eq.s32.totalorder %s19, 0
      %p82 = por %p80, %p81
      %p83 = scmp.ne.s32.totalorder %s71, %s72
      %p84 = scmp.eq.s32.totalorder %s20, 1
      %p85 = por %p83, %p84
      %p87 = scmp.ne.s32.totalorder %s72, %s86
      %p88 = scmp.eq.s32.totalorder %s20, 0
      %p89 = por %p87, %p88
      %s91 = sadd.s32 %s90, 1
      %p94 = scmp.eq.s32.totalorder %s14, 1
      %p95 = scmp.ne.s32.totalorder %s90, %s92
      %p96 = scmp.eq.s32.totalorder %s14, 0
      %p97 = por %p95, %p96
      %p98 = scmp.ne.s32.totalorder %s90, %s92
      %p99 = scmp.eq.s32.totalorder %s19, 1
      %p100 = por %p98, %p99
      %p101 = scmp.ne.s32.totalorder %s92, %s93
      %p102 = scmp.eq.s32.totalorder %s19, 0
      %p103 = por %p101, %p102
      %p104 = scmp.ne.s32.totalorder %s92, %s93
      %p105 = scmp.eq.s32.totalorder %s20, 1
      %p106 = por %p104, %p105
      %p108 = scmp.ne.s32.totalorder %s93, %s107
      %p109 = scmp.eq.s32.totalorder %s20, 0
      %p110 = por %p108, %p109
      %s112 = sadd.s32 %s111, 1
      %p115 = scmp.eq.s32.totalorder %s14, 1
      %p116 = scmp.ne.s32.totalorder %s111, %s113
      %p117 = scmp.eq.s32.totalorder %s14, 0
      %p118 = por %p116, %p117
      %p119 = scmp.ne.s32.totalorder %s111, %s113
      %p120 = scmp.eq.s32.totalorder %s19, 1
      %p121 = por %p119, %p120
      %p122 = scmp.ne.s32.totalorder %s113, %s114
      %p123 = scmp.eq.s32.totalorder %s19, 0
      %p124 = por %p122, %p123
      %p125 = scmp.ne.s32.totalorder %s113, %s114
      %p126 = scmp.eq.s32.totalorder %s20, 1
      %p127 = por %p125, %p126
      %p129 = scmp.ne.s32.totalorder %s114, %s128
      %p130 = scmp.eq.s32.totalorder %s20, 0
      %p131 = por %p129, %p130
      %s132 = ssub.s32 %s14, %s21
      %p133 = scmp.eq.s32.totalorder %s132, 0
      %s135 = sadd.s32 %s134, 1
      %s136 = scalar_select %p133, %s134, %s135
      %p139 = pneg %p133
      %p140 = scmp.eq.s32.totalorder %s14, 1
      %p141 = por %p139, %p140
      %p142 = scmp.ne.s32.totalorder %s134, %s137
      %p143 = scmp.eq.s32.totalorder %s14, 0
      %p144 = por %p142, %p143
      %p145 = scmp.ne.s32.totalorder %s134, %s137
      %p146 = scmp.eq.s32.totalorder %s19, 1
      %p147 = por %p145, %p146
      %p148 = scmp.ne.s32.totalorder %s137, %s138
      %p149 = scmp.eq.s32.totalorder %s19, 0
      %p150 = por %p148, %p149
      %p151 = scmp.ne.s32.totalorder %s137, %s138
      %p152 = scmp.eq.s32.totalorder %s20, 1
      %p153 = por %p151, %p152
      %p155 = scmp.ne.s32.totalorder %s138, %s154
      %p156 = scmp.eq.s32.totalorder %s20, 0
      %p157 = por %p155, %p156
      %p158 = scmp.le.s32.totalorder 1, %s14
      %p159 = scmp.lt.s32.totalorder %s14, 3
      %p160 = pnand %p158, %p159
      %p161 = pneg %p160
      // Predicated region
      $region9: #{tpu_custom_call.1} parent=5 // pred_check
        _
      $region10: #{tpu_custom_call.1} parent=5 // pred_check_branch
        %163 = sbr.rel (%p160) target = $region12
      $region11: #{tpu_custom_call.1} parent=5 // pred_region
        %s164 = ssub.s32 %s14, 1
        // Predicated region
        $region13: #{tpu_custom_call.1} parent=11 // pred_check
          %p165 = pneg %p61
        $region14: #{tpu_custom_call.1} parent=11 // pred_check_branch
          %167 = sbr.rel (%p165) target = $region16
        $region15: #{tpu_custom_call.1} parent=11 // pred_region
          _
        $region16: #{tpu_custom_call.1} parent=11 // pred_fallthru
          _
        // Predicated region
        $region17: #{tpu_custom_call.1} parent=11 // pred_check
          %p168 = pneg %p82
        $region18: #{tpu_custom_call.1} parent=11 // pred_check_branch
          %170 = sbr.rel (%p168) target = $region20
        $region19: #{tpu_custom_call.1} parent=11 // pred_region
          _
        $region20: #{tpu_custom_call.1} parent=11 // pred_fallthru
          _
        // Predicated region
        $region21: #{tpu_custom_call.1} parent=11 // pred_check
          %p171 = pneg %p103
        $region22: #{tpu_custom_call.1} parent=11 // pred_check_branch
          %173 = sbr.rel (%p171) target = $region24
        $region23: #{tpu_custom_call.1} parent=11 // pred_region
          _
        $region24: #{tpu_custom_call.1} parent=11 // pred_fallthru
          _
        // Predicated region
        $region25: #{tpu_custom_call.1} parent=11 // pred_check
          %p174 = pneg %p124
        $region26: #{tpu_custom_call.1} parent=11 // pred_check_branch
          %176 = sbr.rel (%p174) target = $region28
        $region27: #{tpu_custom_call.1} parent=11 // pred_region
          _
        $region28: #{tpu_custom_call.1} parent=11 // pred_fallthru
          _
      $region12: #{tpu_custom_call.1} parent=5 // pred_fallthru
        _
      %p177 = scmp.lt.s32.totalorder %s14, 2
      // Predicated region
      $region29: #{tpu_custom_call.1} parent=5 // pred_check
        %p178 = pneg %p177
      $region30: #{tpu_custom_call.1} parent=5 // pred_check_branch
        %180 = sbr.rel (%p178) target = $region32
      $region31: #{tpu_custom_call.1} parent=5 // pred_region
        // Predicated region
        $region33: #{tpu_custom_call.1} parent=31 // pred_check
          %p181 = pneg %p34
        $region34: #{tpu_custom_call.1} parent=31 // pred_check_branch
          %183 = sbr.rel (%p181) target = $region36
        $region35: #{tpu_custom_call.1} parent=31 // pred_region
          %p184 = scmp.lt.s32.totalorder %s14, 1
          %s185 = scalar_select %p184, %s14, 1
          %s186 = smul.addr %s185, 4
          %s187 = scalar_lea.vmem %s0, %s186
        $region36: #{tpu_custom_call.1} parent=31 // pred_fallthru
          _
      $region32: #{tpu_custom_call.1} parent=5 // pred_fallthru
        _
      %p188 = scmp.le.s32.totalorder 1, %s14
      %p189 = scmp.lt.s32.totalorder %s14, 3
      %p190 = pnand %p188, %p189
      %p191 = pneg %p190
      // Predicated region
      $region37: #{tpu_custom_call.1} parent=5 // pred_check
        _
      $region38: #{tpu_custom_call.1} parent=5 // pred_check_branch
        %193 = sbr.rel (%p190) target = $region40
      $region39: #{tpu_custom_call.1} parent=5 // pred_region
        %s194 = ssub.s32 %s14, 1
        %p195 = scmp.lt.s32.totalorder %s19, 1
        %s196 = scalar_select %p195, %s19, 1
        %s197 = smul.addr %s196, 4
        %s198 = scalar_lea.vmem %s0, %s197
        %p199 = pneg %p40
        %p200 = pneg %p37
        %p201 = pneg %p61
        %p202 = pneg %p58
        %p203 = pneg %p82
        %p204 = pneg %p79
        %p205 = pneg %p103
        %p206 = pneg %p100
        %p207 = pneg %p124
        %p208 = pneg %p121
        %p209 = pneg %p150
        %p210 = pneg %p147
        %s211 = sand.u32 %s137, 1
        %s212 = scalar_lea.sflag [#allocation3], %s211
        %s213 = sand.u32 %s137, 1
        %s214 = smul.addr %s213, 8
        %s215 = scalar_lea.vmem [#allocation2], %s214
        %p216 = scmp.lt.s32.totalorder %s19, 1
        %s217 = scalar_select %p216, %s19, 1
        %s218 = smul.addr %s217, 4
        %s219 = scalar_lea.vmem %s0, %s218
        %v221 = vld [vmem:[%s219] sm:$0xf]
        %v222 = vld [vmem:[%s1] sm:$0xff]
        %v223 = vld [vmem:[%s1 + $0x8] sm:$0xf]
        %v224 = vld [vmem:[%s1 + $0xc] sm:$0xff]
        %v225 = vld [vmem:[%s1 + $0x14] sm:$0xf]
        %v226 = vld [vmem:[%s1 + $0x18] sm:$0xff]
        %v227 = vld [vmem:[%s1 + $0x20] sm:$0xf]
        %v228 = vld [vmem:[%s1 + $0x24] sm:$0xff]
        %v229 = vld [vmem:[%s1 + $0x2c] sm:$0xf]
        %v230 = vld [vmem:[%s2] sm:$0x7]
        %v232 = vperm.slane %v230, 0
        %v233 = vperm.slane %v230, 1
        %v234 = vperm.slane %v230, 2
        %v246 = vunpack.c.l.b16 %v222
        %v247 = vunpack.c.h.b16 %v222
        %v248 = vunpack.c.l.b16 %v223
        %v249 = vunpack.c.l.b16 %v224
        %v250 = vunpack.c.h.b16 %v224
        %v251 = vunpack.c.l.b16 %v225
        %v252 = vunpack.c.l.b16 %v226
        %v253 = vunpack.c.h.b16 %v226
        %v254 = vunpack.c.l.b16 %v227
        %v255 = vunpack.c.l.b16 %v228
        %v256 = vunpack.c.h.b16 %v228
        %v257 = vunpack.c.l.b16 %v229
        %v258 = vpack.c.b16 %v249, %v246
        %v259 = vpack.c.b16 %v250, %v247
        %v260 = vpack.c.b16 %v251, %v248
        %v261 = vpack.c.b16 %v255, %v252
        %v262 = vpack.c.b16 %v256, %v253
        %v263 = vpack.c.b16 %v257, %v254
        %vm270 = vcmask 261120
        %v272 = vsel %vm270, %v221, 0
        %274 = vmatpush.bf16.msra.mxu0 0
        %275 = vmatpush.bf16.msra.mxu0 0
        %276 = vmatpush.bf16.msra.mxu0 0
        %277 = vmatpush.bf16.msra.mxu0 0
        %278 = vmatpush.bf16.msra.mxu0 0
        %279 = vmatpush.bf16.msra.mxu0 0
        %280 = vmatpush.bf16.msra.mxu0 %v261
        %281 = vmatpush.bf16.msra.mxu0 %v258
        %282 = vmatmul.bf16.gmra.mxu0 %v272
        %v283 = vpop.f32.mrf.mxu0
        %v284 = vadd.f32 %v232, %v283
        %v285 = vpop.f32.mrf.mxu0
        %286 = vdwg.mxu0
        %287 = vmatpush.bf16.msra.mxu0 0
        %288 = vmatpush.bf16.msra.mxu0 0
        %289 = vmatpush.bf16.msra.mxu0 0
        %290 = vmatpush.bf16.msra.mxu0 0
        %291 = vmatpush.bf16.msra.mxu0 0
        %292 = vmatpush.bf16.msra.mxu0 0
        %293 = vmatpush.bf16.msra.mxu0 %v262
        %294 = vmatpush.bf16.msra.mxu0 %v259
        %295 = vmatmul.bf16.gmra.mxu0 %v272
        %v296 = vpop.f32.mrf.mxu0
        %v297 = vadd.f32 %v233, %v296
        %v298 = vpop.f32.mrf.mxu0
        %299 = vdwg.mxu0
        %300 = vmatpush.bf16.msra.mxu0 0
        %301 = vmatpush.bf16.msra.mxu0 0
        %302 = vmatpush.bf16.msra.mxu0 0
        %303 = vmatpush.bf16.msra.mxu0 0
        %304 = vmatpush.bf16.msra.mxu0 0
        %305 = vmatpush.bf16.msra.mxu0 0
        %306 = vmatpush.bf16.msra.mxu0 %v263
        %307 = vmatpush.bf16.msra.mxu0 %v260
        %308 = vmatmul.bf16.gmra.mxu0 %v272
        %v309 = vpop.f32.mrf.mxu0
        %v310 = vadd.f32 %v234, %v309
        %v311 = vpop.f32.mrf.mxu0
        %312 = vdwg.mxu0
        %v313 = vpack.c.bf16 %v310, %v310
        %v314 = vlaneseq
        %v315 = vand.u32 %v314, 127
        %vm316 = vcmp.ge.s32.totalorder %v315, 0
        %vm317 = vcmp.lt.s32.totalorder %v315, 32
        %vm318 = vmand %vm316, %vm317
        %v319 = vsel %vm318, %v297, 0.0
        %320 = vmatpush.xpose.msra.mxu0 0.0
        %321 = vmatpush.xpose.msra.mxu0 0.0
        %322 = vmatpush.xpose.msra.mxu0 0.0
        %323 = vmatpush.xpose.msra.mxu0 0.0
        %324 = vmatpush.xpose.msra.mxu0 0.0
        %325 = vmatpush.xpose.msra.mxu0 0.0
        %326 = vmatpush.xpose.msra.mxu0 0.0
        %327 = vmatpush.xpose.msra.mxu0 0.0
        %328 = vmatpush.xpose.msra.mxu0 0.0
        %329 = vmatpush.xpose.msra.mxu0 0.0
        %330 = vmatpush.xpose.msra.mxu0 0.0
        %331 = vmatpush.xpose.msra.mxu0 0.0
        %332 = vmatpush.xpose.msra.mxu0 0.0
        %333 = vmatpush.xpose.msra.mxu0 0.0
        %334 = vmatpush.xpose.msra.mxu0 0.0
        %335 = vmatpush.xpose.msra.mxu0 %v319
        %336 = vmatmul.f32.gmra.mxu0 %v284
        %v337 = vpop.f32.mrf.mxu0
        %v338 = vadd.f32 0.0, %v337
        %339 = vdwg.mxu0
        %vm340 = vcmask 64512
        %v341 = vsel %vm340, %v338, -inf
        %342 = vmax.xlane.f32.xlu0 %v341
        %v343 = vpop.xlane.xlu0 %342
        %v344 = vsub.f32 %v338, %v343
        %v345 = vmul.f32 %v344, 1.442695
        %v346 = vpow.pop %v345
        %v347 = vsel %vm340, %v346, 0.0
        %348 = vadd.xlane.f32.xlu0 %v347
        %v349 = vpop.xlane.xlu0 %348
        %v350 = vrcp.pop %v349
        %v351 = vmul.f32 %v346, %v350
        %vm352 = vmpackc.low %vm318, %vm318
        %v353 = vsel %vm352, %v313, 0
        %v354 = vpack.c.bf16 %v351, %v351
        %vm355 = vcmp.ge.s32.totalorder %v315, 32
        %vm356 = vcmp.lt.s32.totalorder %v315, 64
        %vm357 = vmand %vm355, %vm356
        %v358 = vsel %vm357, %v297, 0.0
        %359 = vmatpush.xpose.msra.mxu0 0.0
        %360 = vmatpush.xpose.msra.mxu0 0.0
        %361 = vmatpush.xpose.msra.mxu0 0.0
        %362 = vmatpush.xpose.msra.mxu0 0.0
        %363 = vmatpush.xpose.msra.mxu0 0.0
        %364 = vmatpush.xpose.msra.mxu0 0.0
        %365 = vmatpush.xpose.msra.mxu0 0.0
        %366 = vmatpush.xpose.msra.mxu0 0.0
        %367 = vmatpush.xpose.msra.mxu0 0.0
        %368 = vmatpush.xpose.msra.mxu0 0.0
        %369 = vmatpush.xpose.msra.mxu0 0.0
        %370 = vmatpush.xpose.msra.mxu0 0.0
        %371 = vmatpush.xpose.msra.mxu0 0.0
        %372 = vmatpush.xpose.msra.mxu0 0.0
        %373 = vmatpush.xpose.msra.mxu0 0.0
        %374 = vmatpush.xpose.msra.mxu0 %v358
        %375 = vmatmul.f32.gmra.mxu0 %v284
        %v376 = vpop.f32.mrf.mxu0
        %v377 = vadd.f32 0.0, %v376
        %378 = vdwg.mxu0
        %v379 = vsel %vm340, %v377, -inf
        %380 = vmax.xlane.f32.xlu0 %v379
        %v381 = vpop.xlane.xlu0 %380
        %v382 = vsub.f32 %v377, %v381
        %v383 = vmul.f32 %v382, 1.442695
        %v384 = vpow.pop %v383
        %v385 = vsel %vm340, %v384, 0.0
        %386 = vadd.xlane.f32.xlu0 %v385
        %v387 = vpop.xlane.xlu0 %386
        %v388 = vrcp.pop %v387
        %v389 = vmul.f32 %v384, %v388
        %vm390 = vmpackc.low %vm357, %vm357
        %v391 = vsel %vm390, %v313, 0
        %v392 = vpack.c.bf16 %v389, %v389
        %v394 = vsel %vm340, %v392, 0
        %vm396 = vcmask 1043456
        %v398 = vsel %vm396, %v391, 0
        %400 = vmatpush.bf16.msra.mxu0 0
        %401 = vmatpush.bf16.msra.mxu0 0
        %402 = vmatpush.bf16.msra.mxu0 0
        %403 = vmatpush.bf16.msra.mxu0 0
        %404 = vmatpush.bf16.msra.mxu0 0
        %405 = vmatpush.bf16.msra.mxu0 0
        %406 = vmatpush.bf16.msra.mxu0 0
        %407 = vmatpush.bf16.msra.mxu0 %v398
        %408 = vmatmul.bf16.gmra.mxu0 %v394
        %v409 = vpop.f32.mrf.mxu0
        %v410 = vadd.f32 0.0, %v409
        %v411 = vpop.f32.mrf.mxu0
        %412 = vdwg.mxu0
        %v414 = vsel %vm340, %v354, 0
        %v417 = vsel %vm396, %v353, 0
        %419 = vmatpush.bf16.msra.mxu0 0
        %420 = vmatpush.bf16.msra.mxu0 0
        %421 = vmatpush.bf16.msra.mxu0 0
        %422 = vmatpush.bf16.msra.mxu0 0
        %423 = vmatpush.bf16.msra.mxu0 0
        %424 = vmatpush.bf16.msra.mxu0 0
        %425 = vmatpush.bf16.msra.mxu0 0
        %426 = vmatpush.bf16.msra.mxu0 %v417
        %427 = vmatmul.bf16.gmra.mxu0 %v414
        %v428 = vpop.f32.mrf.mxu0
        %v429 = vadd.f32 %v410, %v428
        %v430 = vpop.f32.mrf.mxu0
        %431 = vdwg.mxu0
        %vm432 = vcmp.ge.s32.totalorder %v315, 64
        %vm433 = vcmp.lt.s32.totalorder %v315, 96
        %vm434 = vmand %vm432, %vm433
        %v435 = vsel %vm434, %v297, 0.0
        %436 = vmatpush.xpose.msra.mxu0 0.0
        %437 = vmatpush.xpose.msra.mxu0 0.0
        %438 = vmatpush.xpose.msra.mxu0 0.0
        %439 = vmatpush.xpose.msra.mxu0 0.0
        %440 = vmatpush.xpose.msra.mxu0 0.0
        %441 = vmatpush.xpose.msra.mxu0 0.0
        %442 = vmatpush.xpose.msra.mxu0 0.0
        %443 = vmatpush.xpose.msra.mxu0 0.0
        %444 = vmatpush.xpose.msra.mxu0 0.0
        %445 = vmatpush.xpose.msra.mxu0 0.0
        %446 = vmatpush.xpose.msra.mxu0 0.0
        %447 = vmatpush.xpose.msra.mxu0 0.0
        %448 = vmatpush.xpose.msra.mxu0 0.0
        %449 = vmatpush.xpose.msra.mxu0 0.0
        %450 = vmatpush.xpose.msra.mxu0 0.0
        %451 = vmatpush.xpose.msra.mxu0 %v435
        %452 = vmatmul.f32.gmra.mxu0 %v284
        %v453 = vpop.f32.mrf.mxu0
        %v454 = vadd.f32 0.0, %v453
        %455 = vdwg.mxu0
        %v456 = vsel %vm340, %v454, -inf
        %457 = vmax.xlane.f32.xlu0 %v456
        %v458 = vpop.xlane.xlu0 %457
        %v459 = vsub.f32 %v454, %v458
        %v460 = vmul.f32 %v459, 1.442695
        %v461 = vpow.pop %v460
        %v462 = vsel %vm340, %v461, 0.0
        %463 = vadd.xlane.f32.xlu0 %v462
        %v464 = vpop.xlane.xlu0 %463
        %v465 = vrcp.pop %v464
        %v466 = vmul.f32 %v461, %v465
        %vm467 = vmpackc.low %vm434, %vm434
        %v468 = vsel %vm467, %v313, 0
        %v469 = vpack.c.bf16 %v466, %v466
        %v471 = vsel %vm340, %v469, 0
        %v474 = vsel %vm396, %v468, 0
        %476 = vmatpush.bf16.msra.mxu0 0
        %477 = vmatpush.bf16.msra.mxu0 0
        %478 = vmatpush.bf16.msra.mxu0 0
        %479 = vmatpush.bf16.msra.mxu0 0
        %480 = vmatpush.bf16.msra.mxu0 0
        %481 = vmatpush.bf16.msra.mxu0 0
        %482 = vmatpush.bf16.msra.mxu0 0
        %483 = vmatpush.bf16.msra.mxu0 %v474
        %484 = vmatmul.bf16.gmra.mxu0 %v471
        %v485 = vpop.f32.mrf.mxu0
        %v486 = vadd.f32 0.0, %v485
        %v487 = vpop.f32.mrf.mxu0
        %488 = vdwg.mxu0
        %v489 = vadd.f32 %v429, %v486
        %vm490 = vcmp.ge.s32.totalorder %v315, 96
        %vm491 = vcmp.lt.s32.totalorder %v315, 128
        %vm492 = vmand %vm490, %vm491
        %v493 = vsel %vm492, %v297, 0.0
        %494 = vmatpush.xpose.msra.mxu0 0.0
        %495 = vmatpush.xpose.msra.mxu0 0.0
        %496 = vmatpush.xpose.msra.mxu0 0.0
        %497 = vmatpush.xpose.msra.mxu0 0.0
        %498 = vmatpush.xpose.msra.mxu0 0.0
        %499 = vmatpush.xpose.msra.mxu0 0.0
        %500 = vmatpush.xpose.msra.mxu0 0.0
        %501 = vmatpush.xpose.msra.mxu0 0.0
        %502 = vmatpush.xpose.msra.mxu0 0.0
        %503 = vmatpush.xpose.msra.mxu0 0.0
        %504 = vmatpush.xpose.msra.mxu0 0.0
        %505 = vmatpush.xpose.msra.mxu0 0.0
        %506 = vmatpush.xpose.msra.mxu0 0.0
        %507 = vmatpush.xpose.msra.mxu0 0.0
        %508 = vmatpush.xpose.msra.mxu0 0.0
        %509 = vmatpush.xpose.msra.mxu0 %v493
        %510 = vmatmul.f32.gmra.mxu0 %v284
        %v511 = vpop.f32.mrf.mxu0
        %v512 = vadd.f32 0.0, %v511
        %513 = vdwg.mxu0
        %v514 = vsel %vm340, %v512, -inf
        %515 = vmax.xlane.f32.xlu0 %v514
        %v516 = vpop.xlane.xlu0 %515
        %v517 = vsub.f32 %v512, %v516
        %v518 = vmul.f32 %v517, 1.442695
        %v519 = vpow.pop %v518
        %v520 = vsel %vm340, %v519, 0.0
        %521 = vadd.xlane.f32.xlu0 %v520
        %v522 = vpop.xlane.xlu0 %521
        %v523 = vrcp.pop %v522
        %v524 = vmul.f32 %v519, %v523
        %vm525 = vmpackc.low %vm492, %vm492
        %v526 = vsel %vm525, %v313, 0
        %v527 = vpack.c.bf16 %v524, %v524
        %v529 = vsel %vm340, %v527, 0
        %v532 = vsel %vm396, %v526, 0
        %534 = vmatpush.bf16.msra.mxu0 0
        %535 = vmatpush.bf16.msra.mxu0 0
        %536 = vmatpush.bf16.msra.mxu0 0
        %537 = vmatpush.bf16.msra.mxu0 0
        %538 = vmatpush.bf16.msra.mxu0 0
        %539 = vmatpush.bf16.msra.mxu0 0
        %540 = vmatpush.bf16.msra.mxu0 0
        %541 = vmatpush.bf16.msra.mxu0 %v532
        %542 = vmatmul.bf16.gmra.mxu0 %v529
        %v543 = vpop.f32.mrf.mxu0
        %v544 = vadd.f32 0.0, %v543
        %v545 = vpop.f32.mrf.mxu0
        %546 = vdwg.mxu0
        %v547 = vadd.f32 %v489, %v544
        %v548 = vpack.c.bf16 %v547, %v547
        %v549 = vld [vmem:[%s3] sm:$0xf]
        %v550 = vld [vmem:[%s3 + $0x4] sm:$0xf]
        %v551 = vld [vmem:[%s3 + $0x8] sm:$0xf]
        %v552 = vld [vmem:[%s3 + $0xc] sm:$0xf]
        %v553 = vld [vmem:[%s3 + $0x10] sm:$0xf]
        %v554 = vld [vmem:[%s3 + $0x14] sm:$0xf]
        %v555 = vld [vmem:[%s3 + $0x18] sm:$0xf]
        %v556 = vld [vmem:[%s3 + $0x1c] sm:$0xf]
        %v557 = vld [vmem:[%s3 + $0x20] sm:$0xf]
        %v558 = vld [vmem:[%s3 + $0x24] sm:$0xf]
        %v559 = vld [vmem:[%s3 + $0x28] sm:$0xf]
        %v560 = vld [vmem:[%s3 + $0x2c] sm:$0xf]
        %v561 = vld [vmem:[%s3 + $0x30] sm:$0xf]
        %v562 = vld [vmem:[%s3 + $0x34] sm:$0xf]
        %v563 = vld [vmem:[%s3 + $0x38] sm:$0xf]
        %v564 = vld [vmem:[%s3 + $0x3c] sm:$0xf]
        %v565 = vld [vmem:[%s4] sm:$0x1]
        %v567 = vperm.slane %v565, 0
        %v585 = vunpack.c.l.b16 %v549
        %v586 = vunpack.c.l.b16 %v550
        %v587 = vunpack.c.l.b16 %v551
        %v588 = vunpack.c.l.b16 %v552
        %v589 = vunpack.c.l.b16 %v553
        %v590 = vunpack.c.l.b16 %v554
        %v591 = vunpack.c.l.b16 %v555
        %v592 = vunpack.c.l.b16 %v556
        %v593 = vunpack.c.l.b16 %v557
        %v594 = vunpack.c.l.b16 %v558
        %v595 = vunpack.c.l.b16 %v559
        %v596 = vunpack.c.l.b16 %v560
        %v597 = vunpack.c.l.b16 %v561
        %v598 = vunpack.c.l.b16 %v562
        %v599 = vunpack.c.l.b16 %v563
        %v600 = vunpack.c.l.b16 %v564
        %v601 = vpack.c.b16 %v586, %v585
        %v602 = vpack.c.b16 %v588, %v587
        %v603 = vpack.c.b16 %v590, %v589
        %v604 = vpack.c.b16 %v592, %v591
        %v605 = vpack.c.b16 %v594, %v593
        %v606 = vpack.c.b16 %v596, %v595
        %v607 = vpack.c.b16 %v598, %v597
        %v608 = vpack.c.b16 %v600, %v599
        %617 = vmatpush.bf16.msra.mxu0 %v608
        %618 = vmatpush.bf16.msra.mxu0 %v607
        %619 = vmatpush.bf16.msra.mxu0 %v606
        %620 = vmatpush.bf16.msra.mxu0 %v605
        %621 = vmatpush.bf16.msra.mxu0 %v604
        %622 = vmatpush.bf16.msra.mxu0 %v603
        %623 = vmatpush.bf16.msra.mxu0 %v602
        %624 = vmatpush.bf16.msra.mxu0 %v601
        %625 = vmatmul.bf16.gmra.mxu0 %v548
        %v626 = vpop.f32.mrf.mxu0
        %v627 = vadd.f32 %v567, %v626
        %v628 = vpop.f32.mrf.mxu0
        %629 = vdwg.mxu0
        %630 = vst.msk [vmem:[%s215] sm:$0xff] %vm270, %v627
        %s631 = sand.u32 %s137, 1
        %s632 = scalar_lea.sflag [#allocation3], %s631
        %s633 = sand.u32 %s137, 1
        %s634 = smul.addr %s633, 8
        %s635 = scalar_lea.vmem [#allocation2], %s634
        // Predicated region
        $region41: #{tpu_custom_call.1} parent=39 // pred_check
          %p636 = pneg %p147
        $region42: #{tpu_custom_call.1} parent=39 // pred_check_branch
          %638 = sbr.rel (%p636) target = $region44
        $region43: #{tpu_custom_call.1} parent=39 // pred_region
          %640 = vsyncadd %s632, 0
          %s641 = smul.addr %s19, 8
          %s642 = scalar_lea.hbm %s5, %s641
          %s644 = sshll.u32 %s635, 4
          %s645 = int_to_ptr.vmem [resolvable:$true] %s644
          %s646 = sshll.u32 %s642, 4
          %s647 = int_to_ptr.hbm [resolvable:$true] %s646
          %649 = dma.vmem_to_hbm [thread:$0]  %s645, 128, %s647, %s632
        $region44: #{tpu_custom_call.1} parent=39 // pred_fallthru
          _
      $region40: #{tpu_custom_call.1} parent=5 // pred_fallthru
        _
      %p650 = scmp.le.s32.totalorder 2, %s14
      // Predicated region
      $region45: #{tpu_custom_call.1} parent=5 // pred_check
        %p651 = pneg %p650
      $region46: #{tpu_custom_call.1} parent=5 // pred_check_branch
        %653 = sbr.rel (%p651) target = $region48
      $region47: #{tpu_custom_call.1} parent=5 // pred_region
        %s654 = ssub.s32 %s14, 2
        // Predicated region
        $region49: #{tpu_custom_call.1} parent=47 // pred_check
          %p655 = pneg %p153
        $region50: #{tpu_custom_call.1} parent=47 // pred_check_branch
          %657 = sbr.rel (%p655) target = $region52
        $region51: #{tpu_custom_call.1} parent=47 // pred_region
          %s658 = sand.u32 %s138, 1
          %s659 = scalar_lea.sflag [#allocation3], %s658
          %s660 = sand.u32 %s138, 1
          %s661 = smul.addr %s660, 8
          %s662 = scalar_lea.vmem [#allocation2], %s661
          %664 = dma.done %s659, 128
        $region52: #{tpu_custom_call.1} parent=47 // pred_fallthru
          _
      $region48: #{tpu_custom_call.1} parent=5 // pred_fallthru
        _
    $region6: #{tpu_custom_call.1} parent=1 // loop_footer
      %s18 = sadd.s32 1, %s14
    $region7: #{tpu_custom_call.1} parent=1 // loop_footer_branch
      %13 = sbr.rel target = $region3
    $region8: #{tpu_custom_call.1} parent=1 // loop_exit
      _
    %665 = vsyncpa [#allocation3], 1
    %s666 = scalar_lea.sflag [#allocation3], 1
    %667 = vsyncpa %s666, 1

</llo_original>
